<compile_context>
chip_gen: v5e
topology: v5e:2x2
jax: 0.10.0
libtpu: 0.0.40
codegen_flags: <defaults>
</compile_context>

<pallas_src>
import functools

import jax
import jax.numpy as jnp
from jax.experimental import pallas as pl
from jax.experimental.pallas import tpu as pltpu


def _round_up(n, m):
    return ((n + m - 1) // m) * m


def _critic_kernel(x_ref, w1_ref, b1_ref, w2_ref, b2_ref, w3_ref, b3_ref, o_ref):
    # x_ref : (size_obs, TB) bf16   -- batch on the 128-lane axis
    # w1    : (32, size_obs) bf16   w2: (32, 32) bf16      (PyTorch (out, in) layout)
    # b1,b2 : (32, 1) f32           w3: (32, 1) f32 column  b3: (1, 1) f32
    # o_ref : (1, TB) f32           -- lane-dense store
    xT = x_ref[...]                                                    # bf16

    h1 = jnp.dot(w1_ref[...], xT, preferred_element_type=jnp.float32) + b1_ref[...]
    h1 = jnp.maximum(h1, 0.0)                                          # (32, TB) f32

    h2 = jnp.dot(w2_ref[...], h1.astype(jnp.bfloat16),
                 preferred_element_type=jnp.float32) + b2_ref[...]
    h2 = jnp.maximum(h2, 0.0)                                          # (32, TB) f32

    # Final Linear(32 -> 1) off the MXU: VPU multiply + XLU cross-sublane reduction.
    out = jnp.sum(h2 * w3_ref[...], axis=0, keepdims=True) + b3_ref[...]
    o_ref[...] = out.astype(o_ref.dtype)                               # (1, TB)


def _forward_xt_impl(xT, params, *, block_rows):
    """Core: xT is (size_obs, B) (batch-in-lanes).  Returns (B, 1) float32."""
    size_obs, B = xT.shape

    w1 = params["w1"].astype(jnp.bfloat16)                 # (32, size_obs)
    b1 = params["b1"].astype(jnp.float32).reshape(-1, 1)   # (32, 1)
    w2 = params["w2"].astype(jnp.bfloat16)                 # (32, 32)
    b2 = params["b2"].astype(jnp.float32).reshape(-1, 1)   # (32, 1)
    w3 = params["w3"].astype(jnp.float32).reshape(-1, 1)   # (32, 1) column of the (1,32) weight
    b3 = params["b3"].astype(jnp.float32).reshape(1, 1)    # (1, 1)

    xT = xT.astype(jnp.bfloat16)

    # Batch tile: lane-aligned, large enough to amortize per-step overhead, but split into
    # >=2 grid steps whenever B allows so v7x's second TensorCore gets work.
    half = (B + 1) // 2
    tb = min(block_rows, _round_up(max(half, 1), 128))
    grid = (pl.cdiv(B, tb),)

    # Weights/biases: whole-array blocks, constant index_map -> resident in VMEM across steps.
    resident = lambda a: pl.BlockSpec(a.shape, lambda i: (0,) * a.ndim)

    flops = 2 * B * (w1.shape[0] * w1.shape[1] + w2.shape[0] * w2.shape[1] + w3.shape[0])
    param_bytes = sum(int(a.size) * a.dtype.itemsize for a in (w1, b1, w2, b2, w3, b3))
    bytes_accessed = B * size_obs * 2 + B * 4 + param_bytes   # bf16 input, f32 output

    out_t = pl.pallas_call(
        _critic_kernel,
        out_shape=jax.ShapeDtypeStruct((1, B), jnp.float32),
        grid=grid,
        in_specs=[
            pl.BlockSpec((size_obs, tb), lambda i: (0, i)),   # x tile (13, TB), bf16
            resident(w1), resident(b1),
            resident(w2), resident(b2),
            resident(w3), resident(b3),
        ],
        out_specs=pl.BlockSpec((1, tb), lambda i: (0, i)),    # lane-dense (1, TB) output
        compiler_params=pltpu.CompilerParams(
            dimension_semantics=("parallel",),                # megacore sharding on v7x
            vmem_limit_bytes=48 * 1024 * 1024,                # covers big tiles on v5e's 16MiB default
        ),
        cost_estimate=pl.CostEstimate(
            flops=flops, transcendentals=0, bytes_accessed=bytes_accessed),
    )(xT, w1, b1, w2, b2, w3, b3)

    return out_t.reshape(B, 1)                                # (1,B) -> (B,1) is a free reshape


@functools.partial(jax.jit, static_argnames=("block_rows",))
def model_critic_forward_xt(xT, params, *, block_rows=32768):
    """Negotiated layout: xT is (size_obs, B).  No wrapper transpose pass at all."""
    return _forward_xt_impl(xT, params, block_rows=block_rows)


@functools.partial(jax.jit, static_argnames=("block_rows",))
def model_critic_forward(x, params, *, block_rows=32768):
    """PyTorch ModelCritic.forward semantics: x is (B, size_obs), returns (B, 1) float32."""
    # TODO(synk): layout negotiation — if the upstream producer can emit x already transposed
    # as (size_obs, B), call model_critic_forward_xt directly and skip this HBM transpose pass
    # (it is the single largest remaining cost at big batches).  The bf16 cast is fused into it.
    xT = jnp.transpose(x)
    return _forward_xt_impl(xT, params, block_rows=block_rows)


def init_params(key, size_obs=13, size_layers=(32, 32)):
    """PyTorch nn.Linear-style init, stored in PyTorch's native layouts: w (out,in), b (out,)."""
    dims = [size_obs] + list(size_layers) + [1]
    params = {}
    keys = jax.random.split(key, 2 * (len(dims) - 1))
    for i in range(len(dims) - 1):
        fan_in, fan_out = dims[i], dims[i + 1]
        bound = 1.0 / jnp.sqrt(jnp.asarray(fan_in, jnp.float32))
        params[f"w{i + 1}"] = jax.random.uniform(
            keys[2 * i], (fan_out, fan_in), jnp.float32, -bound, bound)
        params[f"b{i + 1}"] = jax.random.uniform(
            keys[2 * i + 1], (fan_out,), jnp.float32, -bound, bound)
    return params


def reference_forward(x, params):
    """Pure-JAX reference matching the kernel's precision policy (bf16 operands, f32 accum)."""
    bf = lambda a: a.astype(jnp.bfloat16)
    h = jnp.dot(bf(x), bf(params["w1"]).T, preferred_element_type=jnp.float32) + params["b1"]
    h = jnp.maximum(h, 0.0)
    h = jnp.dot(bf(h), bf(params["w2"]).T, preferred_element_type=jnp.float32) + params["b2"]
    h = jnp.maximum(h, 0.0)
    return jnp.dot(h, params["w3"].astype(jnp.float32).T) + params["b3"]


if __name__ == "__main__":
    key = jax.random.PRNGKey(0)
    k_param, k_x = jax.random.split(key)

    size_obs = 13
    batch = 8
    params = init_params(k_param, size_obs=size_obs, size_layers=(32, 32))
    x = jax.random.normal(k_x, (batch, size_obs), dtype=jnp.float32)

    out = jax.block_until_ready(model_critic_forward(x, params))
    ref = reference_forward(x, params)
    assert out.shape == (batch, 1), out.shape
    assert jnp.allclose(out, ref, atol=2e-3, rtol=2e-3), (out, ref)

    # Negotiated-layout entry point (no wrapper transpose) gives the same result.
    out_t = jax.block_until_ready(model_critic_forward_xt(jnp.transpose(x), params))
    assert jnp.allclose(out_t, out, atol=1e-5, rtol=1e-5)

    # Multi-step grid with a non-divisible batch (edge-block masking, >=2 parallel steps).
    big_batch = 4096 + 77
    xb = jax.random.normal(jax.random.PRNGKey(1), (big_batch, size_obs), dtype=jnp.float32)
    out_b = jax.block_until_ready(model_critic_forward(xb, params, block_rows=1024))
    ref_b = reference_forward(xb, params)
    assert out_b.shape == (big_batch, 1), out_b.shape
    assert jnp.allclose(out_b, ref_b, atol=2e-3, rtol=2e-3)

    print("KERNEL_OK")
</pallas_src>

<mosaic_0001>
module attributes {stable_mosaic.version = 11 : i64} {
  func.func @_critic_kernel(%arg0: i32, %arg1: memref<13x128xbf16, #tpu.memory_space<vmem>>, %arg2: memref<32x13xbf16, #tpu.memory_space<vmem>>, %arg3: memref<32x1xf32, #tpu.memory_space<vmem>>, %arg4: memref<32x32xbf16, #tpu.memory_space<vmem>>, %arg5: memref<32x1xf32, #tpu.memory_space<vmem>>, %arg6: memref<32x1xf32, #tpu.memory_space<vmem>>, %arg7: memref<1x1xf32, #tpu.memory_space<vmem>>, %arg8: memref<1x128xf32, #tpu.memory_space<vmem>>) attributes {dimension_semantics = [#tpu.dimension_semantics<parallel>], iteration_bounds = array<i64: 1>, scalar_prefetch = 0 : i64, scratch_operands = 0 : i64, tpu.core_type = #tpu.core_type<tc>, window_params = [{transform_indices = @transform_0, window_bounds = array<i64: 13, 128>}, {pipeline_mode = #tpu.pipeline_mode<synchronous>, transform_indices = @transform_1, window_bounds = array<i64: 32, 13>}, {pipeline_mode = #tpu.pipeline_mode<synchronous>, transform_indices = @transform_2, window_bounds = array<i64: 32, 1>}, {pipeline_mode = #tpu.pipeline_mode<synchronous>, transform_indices = @transform_3, window_bounds = array<i64: 32, 32>}, {pipeline_mode = #tpu.pipeline_mode<synchronous>, transform_indices = @transform_4, window_bounds = array<i64: 32, 1>}, {pipeline_mode = #tpu.pipeline_mode<synchronous>, transform_indices = @transform_5, window_bounds = array<i64: 32, 1>}, {pipeline_mode = #tpu.pipeline_mode<synchronous>, transform_indices = @transform_6, window_bounds = array<i64: 1, 1>}, {transform_indices = @transform_7, window_bounds = array<i64: 1, 128>}]} {
    %c0 = arith.constant 0 : index
    %c0_0 = arith.constant 0 : index
    %0 = vector.load %arg1[%c0, %c0_0] : memref<13x128xbf16, #tpu.memory_space<vmem>>, vector<13x128xbf16>
    %c0_1 = arith.constant 0 : index
    %c0_2 = arith.constant 0 : index
    %1 = vector.load %arg2[%c0_1, %c0_2] : memref<32x13xbf16, #tpu.memory_space<vmem>>, vector<32x13xbf16>
    %cst = arith.constant dense<0.000000e+00> : vector<32x128xf32>
    %2 = tpu.matmul %1, %0, %cst {dimension_numbers = #tpu.dot_dimension_numbers<[1], [0], [0], [1], [0, 0, 1, 1], [], []>} : vector<32x13xbf16>, vector<13x128xbf16>, vector<32x128xf32> -> vector<32x128xf32>
    %c0_3 = arith.constant 0 : index
    %c0_4 = arith.constant 0 : index
    %3 = vector.load %arg3[%c0_3, %c0_4] : memref<32x1xf32, #tpu.memory_space<vmem>>, vector<32x1xf32>
    %4 = vector.broadcast %3 : vector<32x1xf32> to vector<32x128xf32>
    %5 = arith.addf %2, %4 : vector<32x128xf32>
    %cst_5 = arith.constant 0.000000e+00 : f32
    %6 = vector.broadcast %cst_5 : f32 to vector<32x128xf32>
    %7 = arith.maximumf %5, %6 : vector<32x128xf32>
    %c0_6 = arith.constant 0 : index
    %c0_7 = arith.constant 0 : index
    %8 = vector.load %arg4[%c0_6, %c0_7] : memref<32x32xbf16, #tpu.memory_space<vmem>>, vector<32x32xbf16>
    %9 = arith.truncf %7 : vector<32x128xf32> to vector<32x128xbf16>
    %cst_8 = arith.constant dense<0.000000e+00> : vector<32x128xf32>
    %10 = tpu.matmul %8, %9, %cst_8 {dimension_numbers = #tpu.dot_dimension_numbers<[1], [0], [0], [1], [0, 0, 1, 1], [], []>} : vector<32x32xbf16>, vector<32x128xbf16>, vector<32x128xf32> -> vector<32x128xf32>
    %c0_9 = arith.constant 0 : index
    %c0_10 = arith.constant 0 : index
    %11 = vector.load %arg5[%c0_9, %c0_10] : memref<32x1xf32, #tpu.memory_space<vmem>>, vector<32x1xf32>
    %12 = vector.broadcast %11 : vector<32x1xf32> to vector<32x128xf32>
    %13 = arith.addf %10, %12 : vector<32x128xf32>
    %cst_11 = arith.constant 0.000000e+00 : f32
    %14 = vector.broadcast %cst_11 : f32 to vector<32x128xf32>
    %15 = arith.maximumf %13, %14 : vector<32x128xf32>
    %c0_12 = arith.constant 0 : index
    %c0_13 = arith.constant 0 : index
    %16 = vector.load %arg6[%c0_12, %c0_13] : memref<32x1xf32, #tpu.memory_space<vmem>>, vector<32x1xf32>
    %17 = vector.broadcast %16 : vector<32x1xf32> to vector<32x128xf32>
    %18 = arith.mulf %15, %17 : vector<32x128xf32>
    %cst_14 = arith.constant dense<0.000000e+00> : vector<128xf32>
    %19 = vector.multi_reduction <add>, %18, %cst_14 [0] : vector<32x128xf32> to vector<128xf32>
    %20 = vector.shape_cast %19 : vector<128xf32> to vector<1x128xf32>
    %c0_15 = arith.constant 0 : index
    %c0_16 = arith.constant 0 : index
    %21 = vector.load %arg7[%c0_15, %c0_16] : memref<1x1xf32, #tpu.memory_space<vmem>>, vector<1x1xf32>
    %22 = vector.broadcast %21 : vector<1x1xf32> to vector<1x128xf32>
    %23 = arith.addf %20, %22 : vector<1x128xf32>
    %c0_17 = arith.constant 0 : index
    %c0_18 = arith.constant 0 : index
    %24 = vector.load %arg8[%c0_17, %c0_18] : memref<1x128xf32, #tpu.memory_space<vmem>>, vector<1x128xf32>
    tpu.vector_store %arg8[%c0_17, %c0_18], %23 {strides = array<i32>} : memref<1x128xf32, #tpu.memory_space<vmem>>, vector<1x128xf32>,
    return
  }
  func.func @transform_0(%arg0: i32) -> (i32, i32) {
    %c0_i32 = arith.constant 0 : i32
    %c0_i32_0 = arith.constant 0 : i32
    return %c0_i32, %arg0 : i32, i32
  }
  func.func @transform_1(%arg0: i32) -> (i32, i32) {
    %c0_i32 = arith.constant 0 : i32
    %c0_i32_0 = arith.constant 0 : i32
    %c0_i32_1 = arith.constant 0 : i32
    return %c0_i32, %c0_i32_0 : i32, i32
  }
  func.func @transform_2(%arg0: i32) -> (i32, i32) {
    %c0_i32 = arith.constant 0 : i32
    %c0_i32_0 = arith.constant 0 : i32
    %c0_i32_1 = arith.constant 0 : i32
    return %c0_i32, %c0_i32_0 : i32, i32
  }
  func.func @transform_3(%arg0: i32) -> (i32, i32) {
    %c0_i32 = arith.constant 0 : i32
    %c0_i32_0 = arith.constant 0 : i32
    %c0_i32_1 = arith.constant 0 : i32
    return %c0_i32, %c0_i32_0 : i32, i32
  }
  func.func @transform_4(%arg0: i32) -> (i32, i32) {
    %c0_i32 = arith.constant 0 : i32
    %c0_i32_0 = arith.constant 0 : i32
    %c0_i32_1 = arith.constant 0 : i32
    return %c0_i32, %c0_i32_0 : i32, i32
  }
  func.func @transform_5(%arg0: i32) -> (i32, i32) {
    %c0_i32 = arith.constant 0 : i32
    %c0_i32_0 = arith.constant 0 : i32
    %c0_i32_1 = arith.constant 0 : i32
    return %c0_i32, %c0_i32_0 : i32, i32
  }
  func.func @transform_6(%arg0: i32) -> (i32, i32) {
    %c0_i32 = arith.constant 0 : i32
    %c0_i32_0 = arith.constant 0 : i32
    %c0_i32_1 = arith.constant 0 : i32
    return %c0_i32, %c0_i32_0 : i32, i32
  }
  func.func @transform_7(%arg0: i32) -> (i32, i32) {
    %c0_i32 = arith.constant 0 : i32
    %c0_i32_0 = arith.constant 0 : i32
    return %c0_i32, %arg0 : i32, i32
  }
}

</mosaic_0001>

<llo_original>
// kernel: model_critic_forward.1
$region0: #{model_critic_forward.1}
  #allocation0 [shape = 'u32[]', space=smem, size = 0x4, offset = 0x4, fixed_abs, tag = 'smem constant byte address 0x4 - core index']
  #allocation1 [shape = 'u32[72,128]{1,0:T(1,128)}', space=vmem, size = 0x9000, scoped, tag = 'internal scratch']
  #allocation2 [shape = 'f32[1,1]{1,0:T(1,128)S(1)}', space=vmem, size = 0x200, scoped, tag = 'scoped memory for model_critic_forward.1']
  %s0 = inlined_call_operand.vmem [shape: bf16[13,8], index: 0, kind: input, shape index: {}]
  %s1 = inlined_call_operand.vmem [shape: bf16[32,13], index: 1, kind: input, shape index: {}]
  %s2 = inlined_call_operand.vmem [shape: f32[32,1], index: 2, kind: input, shape index: {}]
  %s3 = inlined_call_operand.vmem [shape: bf16[32,32], index: 3, kind: input, shape index: {}]
  %s4 = inlined_call_operand.vmem [shape: f32[32,1], index: 4, kind: input, shape index: {}]
  %s5 = inlined_call_operand.vmem [shape: f32[32,1], index: 5, kind: input, shape index: {}]
  %s6 = inlined_call_operand.<no memory space> [shape: f32[1,1], index: 6, kind: input, shape index: {}]
  %s7 = inlined_call_operand.hbm [shape: f32[1,8], index: 7, kind: output, shape index: {}]
  %s8 = sld [smem:[#allocation0]]
  $region38: #{model_critic_forward.1} parent=0
    _
  %s10 = ssub.s32 1, %s8
  %s11 = scalar_select 0, %s10, %s8
  %v12 = vstv %s6
  %13 = vst [vmem:[#allocation2] sm:$0x1] %v12
  $region1: #{model_critic_forward.1} parent=0
    #allocation3 [shape = 'u8[512]{0}', space=vmem, size = 0x400, scoped, tag = 'output window, operand 0, single buffered']
    #allocation4 [shape = 's32[1]{0}', space=sflag, size = 0x4, scoped, tag = 'scoped memory for model_critic_forward.1']
    %14 = vsyncpa [#allocation4], 0
    // Predicated region
    $region2: #{model_critic_forward.1} parent=1 // pred_check
      _
    $region3: #{model_critic_forward.1} parent=1 // pred_check_branch
      %16 = sbr.rel (0) target = $region5
    $region4: #{model_critic_forward.1} parent=1 // pred_region
      _
    $region5: #{model_critic_forward.1} parent=1 // pred_fallthru
      _
    // Predicated region
    $region6: #{model_critic_forward.1} parent=1 // pred_check
      _
    $region7: #{model_critic_forward.1} parent=1 // pred_check_branch
      %18 = sbr.rel (0) target = $region9
    $region8: #{model_critic_forward.1} parent=1 // pred_region
      _
    $region9: #{model_critic_forward.1} parent=1 // pred_fallthru
      _
    // Predicated region
    $region10: #{model_critic_forward.1} parent=1 // pred_check
      _
    $region11: #{model_critic_forward.1} parent=1 // pred_check_branch
      %20 = sbr.rel (0) target = $region13
    $region12: #{model_critic_forward.1} parent=1 // pred_region
      _
    $region13: #{model_critic_forward.1} parent=1 // pred_fallthru
      _
    // Predicated region
    $region14: #{model_critic_forward.1} parent=1 // pred_check
      _
    $region15: #{model_critic_forward.1} parent=1 // pred_check_branch
      %22 = sbr.rel (0) target = $region17
    $region16: #{model_critic_forward.1} parent=1 // pred_region
      _
    $region17: #{model_critic_forward.1} parent=1 // pred_fallthru
      _
    // Predicated region
    $region18: #{model_critic_forward.1} parent=1 // pred_check
      _
    $region19: #{model_critic_forward.1} parent=1 // pred_check_branch
      %24 = sbr.rel (0) target = $region21
    $region20: #{model_critic_forward.1} parent=1 // pred_region
      _
    $region21: #{model_critic_forward.1} parent=1 // pred_fallthru
      _
    // Predicated region
    $region22: #{model_critic_forward.1} parent=1 // pred_check
      _
    $region23: #{model_critic_forward.1} parent=1 // pred_check_branch
      %26 = sbr.rel (0) target = $region25
    $region24: #{model_critic_forward.1} parent=1 // pred_region
      _
    $region25: #{model_critic_forward.1} parent=1 // pred_fallthru
      _
    // Predicated region
    $region26: #{model_critic_forward.1} parent=1 // pred_check
      _
    $region27: #{model_critic_forward.1} parent=1 // pred_check_branch
      %28 = sbr.rel (0) target = $region29
    $region28: #{model_critic_forward.1} parent=1 // pred_region
      _
    $region29: #{model_critic_forward.1} parent=1 // pred_fallthru
      _
    %v30 = vld [vmem:[%s0] sm:$0xf]
    %v31 = vld [vmem:[%s0 + $0x4] sm:$0x7]
    %v32 = vld [vmem:[%s1] sm:$0xf]
    %v33 = vld [vmem:[%s1 + $0x4] sm:$0xf]
    %v34 = vld [vmem:[%s1 + $0x8] sm:$0xf]
    %v35 = vld [vmem:[%s1 + $0xc] sm:$0xf]
    %v36 = vld [vmem:[%s2] sm:$0xff]
    %v37 = vld [vmem:[%s2 + $0x8] sm:$0xff]
    %v38 = vld [vmem:[%s2 + $0x10] sm:$0xff]
    %v39 = vld [vmem:[%s2 + $0x18] sm:$0xff]
    %41 = vset.pattern.permute.xlu0 0
    %42 = vperm.xlu0 %41, %v36
    %v43 = vpop.permute.xlu0 %42
    %46 = vset.pattern.permute.xlu0 0
    %47 = vperm.xlu0 %46, %v37
    %v48 = vpop.permute.xlu0 %47
    %51 = vset.pattern.permute.xlu0 0
    %52 = vperm.xlu0 %51, %v38
    %v53 = vpop.permute.xlu0 %52
    %56 = vset.pattern.permute.xlu0 0
    %57 = vperm.xlu0 %56, %v39
    %v58 = vpop.permute.xlu0 %57
    %v64 = vunpack.c.l.b16 %v32
    %v65 = vunpack.c.l.b16 %v33
    %v66 = vunpack.c.l.b16 %v34
    %v67 = vunpack.c.l.b16 %v35
    %v68 = vpack.c.b16 %v65, %v64
    %v69 = vpack.c.b16 %v67, %v66
    %v72 = vunpack.c.l.b16 %v30
    %v73 = vunpack.c.l.b16 %v31
    %v74 = vpack.c.b16 %v73, %v72
    %vm75 = vcmask 105472
    %v77 = vsel %vm75, %v68, 0
    %v80 = vsel %vm75, %v69, 0
    %vm82 = vcmask 1045504
    %vm83 = vcmask 1046528
    %v84 = vsel %vm82, 4294967295, 65535
    %v85 = vsel %vm83, %v84, 0
    %v87 = vand.u32 %v74, %v85
    %89 = vmatpush.bf16.msra.mxu0 0
    %90 = vmatpush.bf16.msra.mxu0 0
    %91 = vmatpush.bf16.msra.mxu0 0
    %92 = vmatpush.bf16.msra.mxu0 0
    %93 = vmatpush.bf16.msra.mxu0 0
    %94 = vmatpush.bf16.msra.mxu0 0
    %95 = vmatpush.bf16.msra.mxu0 0
    %96 = vmatpush.bf16.msra.mxu0 %v87
    %97 = vmatmul.bf16.gmra.mxu0 %v77
    %v98 = vpop.f32.mrf.mxu0
    %v99 = vadd.f32 %v43, %v98
    %v100 = vpop.f32.mrf.mxu0
    %v101 = vadd.f32 %v48, %v100
    %102 = vmatmul.bf16.gmra.mxu0 %v80
    %v103 = vpop.f32.mrf.mxu0
    %v104 = vadd.f32 %v53, %v103
    %v105 = vpop.f32.mrf.mxu0
    %v106 = vadd.f32 %v58, %v105
    %107 = vdwg.mxu0
    %v108 = vmax.f32 %v99, 0.0
    %v109 = vmax.f32 %v101, 0.0
    %v110 = vmax.f32 %v104, 0.0
    %v111 = vmax.f32 %v106, 0.0
    %v112 = vld [vmem:[%s3] sm:$0xf]
    %v113 = vld [vmem:[%s3 + $0x4] sm:$0xf]
    %v114 = vld [vmem:[%s3 + $0x8] sm:$0xf]
    %v115 = vld [vmem:[%s3 + $0xc] sm:$0xf]
    %v116 = vpack.c.bf16 %v109, %v108
    %v117 = vpack.c.bf16 %v111, %v110
    %v118 = vld [vmem:[%s4] sm:$0xff]
    %v119 = vld [vmem:[%s4 + $0x8] sm:$0xff]
    %v120 = vld [vmem:[%s4 + $0x10] sm:$0xff]
    %v121 = vld [vmem:[%s4 + $0x18] sm:$0xff]
    %123 = vset.pattern.permute.xlu0 0
    %124 = vperm.xlu0 %123, %v118
    %v125 = vpop.permute.xlu0 %124
    %128 = vset.pattern.permute.xlu0 0
    %129 = vperm.xlu0 %128, %v119
    %v130 = vpop.permute.xlu0 %129
    %133 = vset.pattern.permute.xlu0 0
    %134 = vperm.xlu0 %133, %v120
    %v135 = vpop.permute.xlu0 %134
    %138 = vset.pattern.permute.xlu0 0
    %139 = vperm.xlu0 %138, %v121
    %v140 = vpop.permute.xlu0 %139
    %v146 = vunpack.c.l.b16 %v112
    %v147 = vunpack.c.l.b16 %v113
    %v148 = vunpack.c.l.b16 %v114
    %v149 = vunpack.c.l.b16 %v115
    %v150 = vpack.c.b16 %v147, %v146
    %v151 = vpack.c.b16 %v149, %v148
    %vm152 = vcmask 261120
    %v154 = vsel %vm152, %v150, 0
    %v157 = vsel %vm152, %v151, 0
    %159 = vmatpush.bf16.msra.mxu0 0
    %160 = vmatpush.bf16.msra.mxu0 0
    %161 = vmatpush.bf16.msra.mxu0 0
    %162 = vmatpush.bf16.msra.mxu0 0
    %163 = vmatpush.bf16.msra.mxu0 0
    %164 = vmatpush.bf16.msra.mxu0 0
    %165 = vmatpush.bf16.msra.mxu0 %v117
    %166 = vmatpush.bf16.msra.mxu0 %v116
    %167 = vmatmul.bf16.gmra.mxu0 %v154
    %v168 = vpop.f32.mrf.mxu0
    %v169 = vadd.f32 %v125, %v168
    %v170 = vpop.f32.mrf.mxu0
    %v171 = vadd.f32 %v130, %v170
    %172 = vmatmul.bf16.gmra.mxu0 %v157
    %v173 = vpop.f32.mrf.mxu0
    %v174 = vadd.f32 %v135, %v173
    %v175 = vpop.f32.mrf.mxu0
    %v176 = vadd.f32 %v140, %v175
    %177 = vdwg.mxu0
    %v178 = vmax.f32 %v169, 0.0
    %v179 = vmax.f32 %v171, 0.0
    %v180 = vmax.f32 %v174, 0.0
    %v181 = vmax.f32 %v176, 0.0
    %v182 = vld [vmem:[%s5] sm:$0xff]
    %v183 = vld [vmem:[%s5 + $0x8] sm:$0xff]
    %v184 = vld [vmem:[%s5 + $0x10] sm:$0xff]
    %v185 = vld [vmem:[%s5 + $0x18] sm:$0xff]
    %187 = vset.pattern.permute.xlu0 0
    %188 = vperm.xlu0 %187, %v182
    %v189 = vpop.permute.xlu0 %188
    %192 = vset.pattern.permute.xlu0 0
    %193 = vperm.xlu0 %192, %v183
    %v194 = vpop.permute.xlu0 %193
    %197 = vset.pattern.permute.xlu0 0
    %198 = vperm.xlu0 %197, %v184
    %v199 = vpop.permute.xlu0 %198
    %202 = vset.pattern.permute.xlu0 0
    %203 = vperm.xlu0 %202, %v185
    %v204 = vpop.permute.xlu0 %203
    %v206 = vmul.f32 %v178, %v189
    %v207 = vmul.f32 %v179, %v194
    %v208 = vmul.f32 %v180, %v199
    %v209 = vmul.f32 %v181, %v204
    %v210 = vadd.f32 %v206, %v207
    %v211 = vadd.f32 %v210, %v208
    %v212 = vadd.f32 %v211, %v209
    %v213 = vrot.slane %v212, 4
    %v214 = vadd.f32 %v212, %v213
    %v215 = vrot.slane %v214, 2
    %v216 = vadd.f32 %v214, %v215
    %v217 = vrot.slane %v216, 1
    %v218 = vadd.f32 %v216, %v217
    %v219 = vld [vmem:[#allocation2] sm:$0x1]
    %221 = vset.pattern.permute.xlu0 0
    %222 = vperm.xlu0 %221, %v219
    %v223 = vpop.permute.xlu0 %222
    %v225 = vperm.slane %v223, 0
    %v226 = vadd.f32 %v218, %v225
    %227 = vst [vmem:[#allocation3] sm:$0x1] %v226
    // Predicated region
    $region30: #{model_critic_forward.1} parent=1 // pred_check
      _
    $region31: #{model_critic_forward.1} parent=1 // pred_check_branch
      %229 = sbr.rel (0) target = $region33
    $region32: #{model_critic_forward.1} parent=1 // pred_region
      %231 = vsyncadd [#allocation4], 0
      %s233 = sshll.u32 [#allocation3], 4
      %s234 = int_to_ptr.vmem [resolvable:$true] %s233
      %s235 = sshll.u32 %s7, 4
      %s236 = int_to_ptr.hbm [resolvable:$true] %s235
      %238 = dma.vmem_to_hbm [thread:$0]  %s234, 16, %s236, [#allocation4]
    $region33: #{model_critic_forward.1} parent=1 // pred_fallthru
      _
    // Predicated region
    $region34: #{model_critic_forward.1} parent=1 // pred_check
      _
    $region35: #{model_critic_forward.1} parent=1 // pred_check_branch
      %240 = sbr.rel (0) target = $region37
    $region36: #{model_critic_forward.1} parent=1 // pred_region
      %242 = dma.done [#allocation4], 16
    $region37: #{model_critic_forward.1} parent=1 // pred_fallthru
      _
    %243 = vsyncpa [#allocation4], 1

</llo_original>
